<compile_context>
chip_gen: v7x
topology: tpu7x:2x2x1
jax: 0.10.0
libtpu: 0.0.40
codegen_flags: <defaults>
</compile_context>

<pallas_src>
import functools

import jax
import jax.numpy as jnp
from jax.experimental import pallas as pl
from jax.experimental.pallas import tpu as pltpu


def _identity_copy_kernel(k_ref, o_ref):
    # forward() is `return self.kernel`; reproduce it as a whole-block copy.
    o_ref[...] = k_ref[...]


def _kernel_forward_lane_dense(kernel_2d: jax.Array) -> jax.Array:
    """Identity Pallas call on a lane-dense (1, K) view of the parameter."""
    k = kernel_2d.shape[1]
    itemsize = jnp.dtype(kernel_2d.dtype).itemsize
    return pl.pallas_call(
        _identity_copy_kernel,
        out_shape=jax.ShapeDtypeStruct(kernel_2d.shape, kernel_2d.dtype),
        # No grid: single invocation, whole array resident in VMEM.
        in_specs=[pl.BlockSpec(memory_space=pltpu.MemorySpace.VMEM)],
        out_specs=pl.BlockSpec(memory_space=pltpu.MemorySpace.VMEM),
        # Tell XLA this call is ~zero work so neighbors can schedule around it.
        cost_estimate=pl.CostEstimate(
            flops=0, transcendentals=0, bytes_accessed=2 * k * itemsize
        ),
    )(kernel_2d)


@jax.jit
def kernel_forward(kernel_param: jax.Array) -> jax.Array:
    """Pallas equivalent of Kernel.forward(): returns the kernel parameter.

    Accepts the PyTorch-layout parameter (1, 1, K, 1); internally the copy is
    done on a lane-dense (1, K) view and reshaped back at the boundary.
    """
    k = kernel_param.shape[2]
    lane_dense = kernel_param.reshape(1, k)
    out = _kernel_forward_lane_dense(lane_dense)
    return out.reshape(kernel_param.shape)


def kernel_forward_direct(kernel_param: jax.Array) -> jax.Array:
    """Recommended production path: forward() is an identity, so just return
    the parameter (XLA folds it into any consumer for free).  Use this — or
    pass `kernel_param` straight into the downstream conv/matmul kernel —
    when this module is embedded in a larger model."""
    return kernel_param


def init_kernel_param(key, bandM=3, regularity=2):
    """Deterministic re-implementation of the module's __init__.

    int bandM path : randn(1,1,K,1) then xavier_normal_(gain=1.0).
    list bandM path: tensor(bandM).reshape(1,1,K,1).
    """
    if isinstance(bandM, int):
        kernel_size = regularity * bandM
        # xavier_normal for shape (1, 1, K, 1):
        #   fan_in  = 1 * (K*1) = K,  fan_out = 1 * (K*1) = K
        #   std = gain * sqrt(2 / (fan_in + fan_out)) = sqrt(1 / K)
        std = (1.0 / kernel_size) ** 0.5
        return jax.random.normal(key, (1, 1, kernel_size, 1), dtype=jnp.float32) * std
    else:
        kernel_size = len(bandM)
        return jnp.asarray(bandM, dtype=jnp.float32).reshape(1, 1, kernel_size, 1)


if __name__ == "__main__":
    key = jax.random.PRNGKey(0)

    # Default module configuration: bandM=3, regularity=2 -> kernelSize=6.
    kernel_param = init_kernel_param(key, bandM=3, regularity=2)

    out = jax.block_until_ready(kernel_forward(kernel_param))

    # forward() must return the parameter values (shape (1,1,6,1)).
    assert out.shape == (1, 1, 6, 1)
    assert out.dtype == jnp.float32
    assert bool(jnp.allclose(out, kernel_param))

    # The recommended zero-overhead path must agree as well.
    assert bool(jnp.allclose(kernel_forward_direct(kernel_param), out))

    # Also exercise the list-valued bandM branch once (K=4).
    kernel_param_list = init_kernel_param(key, bandM=[0.1, -0.2, 0.3, 0.4])
    out_list = jax.block_until_ready(kernel_forward(kernel_param_list))
    assert out_list.shape == (1, 1, 4, 1)
    assert bool(jnp.allclose(out_list, kernel_param_list))

    print("KERNEL_OK")
</pallas_src>

<mosaic_0001>
module attributes {stable_mosaic.version = 11 : i64} {
  func.func @_identity_copy_kernel(%arg0: memref<1x6xf32, #tpu.memory_space<vmem>>, %arg1: memref<1x6xf32, #tpu.memory_space<vmem>>) attributes {dimension_semantics = [], scalar_prefetch = 0 : i64, scratch_operands = 0 : i64, tpu.core_type = #tpu.core_type<tc>} {
    %c0 = arith.constant 0 : index
    %c0_0 = arith.constant 0 : index
    %0 = vector.load %arg0[%c0, %c0_0] : memref<1x6xf32, #tpu.memory_space<vmem>>, vector<1x6xf32>
    %c0_1 = arith.constant 0 : index
    %c0_2 = arith.constant 0 : index
    %1 = vector.load %arg1[%c0_1, %c0_2] : memref<1x6xf32, #tpu.memory_space<vmem>>, vector<1x6xf32>
    tpu.vector_store %arg1[%c0_1, %c0_2], %0 {strides = array<i32>} : memref<1x6xf32, #tpu.memory_space<vmem>>, vector<1x6xf32>,
    return
  }
}

</mosaic_0001>

<llo_original>
// kernel: kernel_forward.1
$region0: #{kernel_forward.1}
  #allocation0 [shape = 'u32[]', space=smem, size = 0x4, offset = 0x4, fixed_abs, tag = 'smem constant byte address 0x4 - core index']
  #allocation1 [shape = 'u32[144,128]{1,0:T(1,128)}', space=vmem, size = 0x12000, scoped, tag = 'internal scratch']
  %s0 = inlined_call_operand.vmem [shape: f32[1,6], index: 0, kind: input, shape index: {}]
  %s1 = inlined_call_operand.hbm [shape: f32[1,6], index: 1, kind: output, shape index: {}]
  %s2 = sld [smem:[#allocation0]]
  $region14: #{kernel_forward.1} parent=0
    _
  %s4 = ssub.s32 1, %s2
  %s5 = scalar_select 0, %s4, %s2
  $region1: #{kernel_forward.1} parent=0
    #allocation2 [shape = 'u8[512]{0}', space=vmem, size = 0x400, scoped, tag = 'output window, operand 0, single buffered']
    #allocation3 [shape = 's32[1]{0}', space=sflag, size = 0x4, scoped, tag = 'scoped memory for kernel_forward.1']
    %6 = vsyncpa [#allocation3], 0
    // Predicated region
    $region2: #{kernel_forward.1} parent=1 // pred_check
      _
    $region3: #{kernel_forward.1} parent=1 // pred_check_branch
      %8 = sbr.rel (0) target = $region5
    $region4: #{kernel_forward.1} parent=1 // pred_region
      _
    $region5: #{kernel_forward.1} parent=1 // pred_fallthru
      _
    %v9 = vld [vmem:[%s0] sm:$0x1]
    %vm10 = vcmask 40960
    %11 = vst.msk [vmem:[#allocation2] sm:$0x1] %vm10, %v9
    // Predicated region
    $region6: #{kernel_forward.1} parent=1 // pred_check
      _
    $region7: #{kernel_forward.1} parent=1 // pred_check_branch
      %13 = sbr.rel (0) target = $region9
    $region8: #{kernel_forward.1} parent=1 // pred_region
      %s15 = ssub.s32 16, 16
      %16 = vsyncadd [#allocation3], %s15
      %s18 = sshll.u32 [#allocation2], 4
      %s19 = int_to_ptr.vmem [resolvable:$true] %s18
      %21 = dma.vmem_to_hbm [thread:$0]  %s19, 16, %s1, [#allocation3]
    $region9: #{kernel_forward.1} parent=1 // pred_fallthru
      _
    // Predicated region
    $region10: #{kernel_forward.1} parent=1 // pred_check
      _
    $region11: #{kernel_forward.1} parent=1 // pred_check_branch
      %23 = sbr.rel (0) target = $region13
    $region12: #{kernel_forward.1} parent=1 // pred_region
      %24 = dma.done [#allocation3], 16
    $region13: #{kernel_forward.1} parent=1 // pred_fallthru
      _
    %25 = vsyncpa [#allocation3], 1

</llo_original>
